<compile_context>
chip_gen: v5e
topology: v5e:2x2
jax: 0.10.0
libtpu: 0.0.40
codegen_flags: <defaults>
</compile_context>

<pallas_src>
import functools

import jax
import jax.numpy as jnp
from jax.experimental import pallas as pl
from jax.experimental.pallas import tpu as pltpu


# ------------------------------------------------------------------ small helpers

def _round_up(x, m):
    return ((x + m - 1) // m) * m


def _round_down(x, m):
    return (x // m) * m


def _tpu_vmem_bytes():
    """Physical VMEM bytes per TensorCore (conservative fallback if query fails)."""
    try:
        info = pltpu.get_tpu_info()
        vmem = int(getattr(info, "vmem_capacity_bytes", 0))
        if vmem > 0:
            return vmem
    except Exception:
        pass
    return 64 << 20          # v7x-class: the most restrictive generation


def _pick_fold(c, w):
    """Fold factor f (divides C): view the W axis as f*W lanes so blocks are
    lane-dense (>=128 lanes) on both the read and the write side."""
    if w >= 128:
        return 1                                    # already lane-dense
    if c * w <= 256:
        return c                                    # tiny: one lane-row holds it all
    target = -(-128 // w)                           # ceil(128 / W)
    for d in range(target, min(c, 4 * target) + 1):
        if c % d == 0:
            return d
    # TODO(synk): no convenient divisor of C near 128/W; stays correct, just lane-sparse.
    return 1


def _pick_row_tile(num_rows, per_row_bytes, quantum):
    """Row tile + vmem_limit for a purely HBM-bound elementwise kernel.

    per_row_bytes = lane-padded VMEM bytes (in + out) per folded C-row.
    """
    phys = _tpu_vmem_bytes()
    two_tc = phys <= (64 << 20)       # v7x: 64 MiB VMEM and 2 TensorCores per chip
    # Budget for the double-buffered (in + out) pipeline footprint.
    pipe_budget = min(phys // 2, (24 << 20) if two_tc else (48 << 20))
    max_tile = max(quantum, _round_down(pipe_budget // (2 * per_row_bytes), quantum))
    # Mem-bound sweet spot: ~2-4 MB per block reaches >=85% of HBM roofline; larger
    # buys nothing, smaller pays the ~0.35us fixed per-step cost.
    sweet_tile = max(quantum, _round_down((4 << 20) // per_row_bytes, quantum))
    tile = min(max_tile, sweet_tile)
    if two_tc and num_rows > 2 * quantum:
        # Megacore: keep ~8 grid steps (~4 per TC) so prologue/epilogue DMAs are
        # hidden on both cores, but never shrink a block below ~1 MB (per-step
        # overhead dominates at 3.2 TB/s otherwise).
        steps_tile = max(quantum, _round_down(pl.cdiv(num_rows, 8), quantum))
        floor_tile = max(quantum, _round_down((1 << 20) // per_row_bytes, quantum))
        tile = min(tile, min(max_tile, max(steps_tile, floor_tile)))
    if tile >= num_rows:
        tile = num_rows
    else:
        # Balance the ragged tail: same step count, evenly sized blocks.
        steps = pl.cdiv(num_rows, tile)
        tile = min(tile, _round_up(pl.cdiv(num_rows, steps), quantum))
    # W is not tiled: fail loudly if even the minimum block cannot fit in VMEM.
    # TODO(synk): add a second grid axis over W for extremely wide rows.
    min_tile = min(num_rows, quantum)
    if 2 * min_tile * per_row_bytes > phys - (8 << 20):
        raise ValueError(
            f"row too wide for un-tiled W axis: {2 * min_tile * per_row_bytes} bytes "
            f"double-buffered vs {phys} bytes of VMEM")
    vmem_limit = int(min(phys - (4 << 20),
                         max(2 * tile * per_row_bytes + (6 << 20), 32 << 20)))
    return tile, vmem_limit


# ------------------------------------------------------------------ kernel

def _model_kernel(x_ref, o_ref, *, w, b, f, fuse_add):
    # x_ref block: (B, TR, f*W)   o_ref block: (TR, f*B*2W)
    xv = x_ref[...]
    # One wide EUP tanh over the whole block (hoisted out of the store loops).
    v = jnp.tanh(xv + 1.2) if fuse_add else jnp.tanh(xv) + 1.2
    # The dim-2 concat is realized as two stores of the same chunk; the else-branch
    # (B,C)->(C,B) permute is realized purely by the column offsets below.
    for j in range(f):
        chunk = v[:, :, j * w:(j + 1) * w]               # (B, TR, W)
        for bi in range(b):
            col = (j * b + bi) * 2 * w
            o_ref[:, col:col + w] = chunk[bi]
            o_ref[:, col + w:col + 2 * w] = chunk[bi]


# ------------------------------------------------------------------ wrapper

def model_forward(x):
    """Mirrors Model.forward for a 3-D input x of shape (B, C, W)."""
    b, c, w = x.shape
    itemsize = x.dtype.itemsize
    fuse_add = (b == 1)         # B == 1 branch: tanh(x + 1.2); else: tanh(x) + 1.2
    # TODO(synk): PyTorch's .permute(1, 0) on a 3-D tensor is invalid as written; the
    # else branch is interpreted as permute(1, 0, 2) (swap the first two dims).
    f = _pick_fold(c, w)
    rows = c // f
    x_view = x.reshape(b, rows, f * w)      # free: splits/merges contiguous trailing dims

    # Lane-padded VMEM bytes per folded row (what the pipeline actually allocates).
    in_row_bytes = b * _round_up(f * w, 128) * itemsize
    out_row_bytes = _round_up(f * b * 2 * w, 128) * itemsize
    quantum = max(8, 32 // itemsize)        # sublane quantum: 8 f32 / 16 bf16 / 32 int8
    tile, vmem_limit = _pick_row_tile(rows, in_row_bytes + out_row_bytes, quantum)

    out = pl.pallas_call(
        functools.partial(_model_kernel, w=w, b=b, f=f, fuse_add=fuse_add),
        out_shape=jax.ShapeDtypeStruct((rows, f * b * 2 * w), x.dtype),
        grid=(pl.cdiv(rows, tile),),
        in_specs=[pl.BlockSpec((b, tile, f * w), lambda i: (0, i, 0))],
        out_specs=pl.BlockSpec((tile, f * b * 2 * w), lambda i: (i, 0)),
        compiler_params=pltpu.CompilerParams(
            dimension_semantics=("parallel",),           # megacore sharding (v7x only)
            vmem_limit_bytes=vmem_limit),
        cost_estimate=pl.CostEstimate(
            flops=2 * b * c * w,
            transcendentals=b * c * w,
            bytes_accessed=3 * b * c * w * itemsize),
    )(x_view)

    if b == 1:
        return out.reshape(c * 2 * w, 1)
    # (C/f, f*B*2W).reshape(-1) == flatten of permuted (C, B, 2W): no extra HBM traffic.
    return out.reshape(-1)


# ------------------------------------------------------------------ reference + test

def _reference(x):
    y = jnp.concatenate([x, x], axis=2)
    if x.shape[0] == 1:
        return jnp.tanh(y.reshape(-1) + 1.2).reshape(-1, 1)
    return jnp.maximum(jnp.transpose(jnp.tanh(y), (1, 0, 2)) + 1.2, 0.0).reshape(-1)


if __name__ == "__main__":
    key = jax.random.PRNGKey(0)

    # (2, 3, 4):      the module's own shape (else branch, tiny, fully folded block).
    # (1, 3, 4):      exercises the B == 1 branch.
    # (2, 1024, 4):   narrow-W path -> lane-dense folding of C into the lane dim.
    # (2, 2048, 128): wide path -> multi-step row-tiled grid, no folding.
    shapes = [(2, 3, 4), (1, 3, 4), (2, 1024, 4), (2, 2048, 128)]

    ok = True
    for i, shp in enumerate(shapes):
        xi = jax.random.normal(jax.random.fold_in(key, i), shp, dtype=jnp.float32)
        out = model_forward(xi)
        jax.block_until_ready(out)
        ref = _reference(xi)
        ok = ok and (out.shape == ref.shape)
        ok = ok and bool(jnp.allclose(out, ref, atol=1e-6, rtol=1e-6))

    assert ok, "mismatch vs reference"
    print("KERNEL_OK")
</pallas_src>

<mosaic_0001>
module attributes {stable_mosaic.version = 11 : i64} {
  func.func @_model_kernel(%arg0: i32, %arg1: memref<2x1x12xf32, #tpu.memory_space<vmem>>, %arg2: memref<1x48xf32, #tpu.memory_space<vmem>>) attributes {dimension_semantics = [#tpu.dimension_semantics<parallel>], iteration_bounds = array<i64: 1>, scalar_prefetch = 0 : i64, scratch_operands = 0 : i64, tpu.core_type = #tpu.core_type<tc>, window_params = [{transform_indices = @transform_0, window_bounds = array<i64: 2, 1, 12>}, {transform_indices = @transform_1, window_bounds = array<i64: 1, 48>}]} {
    %c0 = arith.constant 0 : index
    %c0_0 = arith.constant 0 : index
    %c0_1 = arith.constant 0 : index
    %0 = vector.load %arg1[%c0, %c0_0, %c0_1] : memref<2x1x12xf32, #tpu.memory_space<vmem>>, vector<2x1x12xf32>
    %1 = math.tanh %0 : vector<2x1x12xf32>
    %cst = arith.constant 1.200000e+00 : f32
    %2 = vector.broadcast %cst : f32 to vector<2x1x12xf32>
    %3 = arith.addf %1, %2 : vector<2x1x12xf32>
    %4 = vector.extract_strided_slice %3 {offsets = [0, 0, 0], sizes = [2, 1, 4], strides = [1, 1, 1]} : vector<2x1x12xf32> to vector<2x1x4xf32>
    %5 = vector.extract_strided_slice %4 {offsets = [0, 0, 0], sizes = [1, 1, 4], strides = [1, 1, 1]} : vector<2x1x4xf32> to vector<1x1x4xf32>
    %6 = vector.shape_cast %5 : vector<1x1x4xf32> to vector<1x4xf32>
    %c0_2 = arith.constant 0 : index
    %c0_3 = arith.constant 0 : index
    %7 = vector.load %arg2[%c0_2, %c0_3] : memref<1x48xf32, #tpu.memory_space<vmem>>, vector<1x4xf32>
    tpu.vector_store %arg2[%c0_2, %c0_3], %6 {strides = array<i32>} : memref<1x48xf32, #tpu.memory_space<vmem>>, vector<1x4xf32>,
    %8 = vector.extract_strided_slice %4 {offsets = [0, 0, 0], sizes = [1, 1, 4], strides = [1, 1, 1]} : vector<2x1x4xf32> to vector<1x1x4xf32>
    %9 = vector.shape_cast %8 : vector<1x1x4xf32> to vector<1x4xf32>
    %c0_4 = arith.constant 0 : index
    %c4 = arith.constant 4 : index
    %10 = vector.load %arg2[%c0_4, %c4] : memref<1x48xf32, #tpu.memory_space<vmem>>, vector<1x4xf32>
    tpu.vector_store %arg2[%c0_4, %c4], %9 {strides = array<i32>} : memref<1x48xf32, #tpu.memory_space<vmem>>, vector<1x4xf32>,
    %11 = vector.extract_strided_slice %4 {offsets = [1, 0, 0], sizes = [1, 1, 4], strides = [1, 1, 1]} : vector<2x1x4xf32> to vector<1x1x4xf32>
    %12 = vector.shape_cast %11 : vector<1x1x4xf32> to vector<1x4xf32>
    %c0_5 = arith.constant 0 : index
    %c8 = arith.constant 8 : index
    %13 = vector.load %arg2[%c0_5, %c8] : memref<1x48xf32, #tpu.memory_space<vmem>>, vector<1x4xf32>
    tpu.vector_store %arg2[%c0_5, %c8], %12 {strides = array<i32>} : memref<1x48xf32, #tpu.memory_space<vmem>>, vector<1x4xf32>,
    %14 = vector.extract_strided_slice %4 {offsets = [1, 0, 0], sizes = [1, 1, 4], strides = [1, 1, 1]} : vector<2x1x4xf32> to vector<1x1x4xf32>
    %15 = vector.shape_cast %14 : vector<1x1x4xf32> to vector<1x4xf32>
    %c0_6 = arith.constant 0 : index
    %c12 = arith.constant 12 : index
    %16 = vector.load %arg2[%c0_6, %c12] : memref<1x48xf32, #tpu.memory_space<vmem>>, vector<1x4xf32>
    tpu.vector_store %arg2[%c0_6, %c12], %15 {strides = array<i32>} : memref<1x48xf32, #tpu.memory_space<vmem>>, vector<1x4xf32>,
    %17 = vector.extract_strided_slice %3 {offsets = [0, 0, 4], sizes = [2, 1, 4], strides = [1, 1, 1]} : vector<2x1x12xf32> to vector<2x1x4xf32>
    %18 = vector.extract_strided_slice %17 {offsets = [0, 0, 0], sizes = [1, 1, 4], strides = [1, 1, 1]} : vector<2x1x4xf32> to vector<1x1x4xf32>
    %19 = vector.shape_cast %18 : vector<1x1x4xf32> to vector<1x4xf32>
    %c0_7 = arith.constant 0 : index
    %c16 = arith.constant 16 : index
    %20 = vector.load %arg2[%c0_7, %c16] : memref<1x48xf32, #tpu.memory_space<vmem>>, vector<1x4xf32>
    tpu.vector_store %arg2[%c0_7, %c16], %19 {strides = array<i32>} : memref<1x48xf32, #tpu.memory_space<vmem>>, vector<1x4xf32>,
    %21 = vector.extract_strided_slice %17 {offsets = [0, 0, 0], sizes = [1, 1, 4], strides = [1, 1, 1]} : vector<2x1x4xf32> to vector<1x1x4xf32>
    %22 = vector.shape_cast %21 : vector<1x1x4xf32> to vector<1x4xf32>
    %c0_8 = arith.constant 0 : index
    %c20 = arith.constant 20 : index
    %23 = vector.load %arg2[%c0_8, %c20] : memref<1x48xf32, #tpu.memory_space<vmem>>, vector<1x4xf32>
    tpu.vector_store %arg2[%c0_8, %c20], %22 {strides = array<i32>} : memref<1x48xf32, #tpu.memory_space<vmem>>, vector<1x4xf32>,
    %24 = vector.extract_strided_slice %17 {offsets = [1, 0, 0], sizes = [1, 1, 4], strides = [1, 1, 1]} : vector<2x1x4xf32> to vector<1x1x4xf32>
    %25 = vector.shape_cast %24 : vector<1x1x4xf32> to vector<1x4xf32>
    %c0_9 = arith.constant 0 : index
    %c24 = arith.constant 24 : index
    %26 = vector.load %arg2[%c0_9, %c24] : memref<1x48xf32, #tpu.memory_space<vmem>>, vector<1x4xf32>
    tpu.vector_store %arg2[%c0_9, %c24], %25 {strides = array<i32>} : memref<1x48xf32, #tpu.memory_space<vmem>>, vector<1x4xf32>,
    %27 = vector.extract_strided_slice %17 {offsets = [1, 0, 0], sizes = [1, 1, 4], strides = [1, 1, 1]} : vector<2x1x4xf32> to vector<1x1x4xf32>
    %28 = vector.shape_cast %27 : vector<1x1x4xf32> to vector<1x4xf32>
    %c0_10 = arith.constant 0 : index
    %c28 = arith.constant 28 : index
    %29 = vector.load %arg2[%c0_10, %c28] : memref<1x48xf32, #tpu.memory_space<vmem>>, vector<1x4xf32>
    tpu.vector_store %arg2[%c0_10, %c28], %28 {strides = array<i32>} : memref<1x48xf32, #tpu.memory_space<vmem>>, vector<1x4xf32>,
    %30 = vector.extract_strided_slice %3 {offsets = [0, 0, 8], sizes = [2, 1, 4], strides = [1, 1, 1]} : vector<2x1x12xf32> to vector<2x1x4xf32>
    %31 = vector.extract_strided_slice %30 {offsets = [0, 0, 0], sizes = [1, 1, 4], strides = [1, 1, 1]} : vector<2x1x4xf32> to vector<1x1x4xf32>
    %32 = vector.shape_cast %31 : vector<1x1x4xf32> to vector<1x4xf32>
    %c0_11 = arith.constant 0 : index
    %c32 = arith.constant 32 : index
    %33 = vector.load %arg2[%c0_11, %c32] : memref<1x48xf32, #tpu.memory_space<vmem>>, vector<1x4xf32>
    tpu.vector_store %arg2[%c0_11, %c32], %32 {strides = array<i32>} : memref<1x48xf32, #tpu.memory_space<vmem>>, vector<1x4xf32>,
    %34 = vector.extract_strided_slice %30 {offsets = [0, 0, 0], sizes = [1, 1, 4], strides = [1, 1, 1]} : vector<2x1x4xf32> to vector<1x1x4xf32>
    %35 = vector.shape_cast %34 : vector<1x1x4xf32> to vector<1x4xf32>
    %c0_12 = arith.constant 0 : index
    %c36 = arith.constant 36 : index
    %36 = vector.load %arg2[%c0_12, %c36] : memref<1x48xf32, #tpu.memory_space<vmem>>, vector<1x4xf32>
    tpu.vector_store %arg2[%c0_12, %c36], %35 {strides = array<i32>} : memref<1x48xf32, #tpu.memory_space<vmem>>, vector<1x4xf32>,
    %37 = vector.extract_strided_slice %30 {offsets = [1, 0, 0], sizes = [1, 1, 4], strides = [1, 1, 1]} : vector<2x1x4xf32> to vector<1x1x4xf32>
    %38 = vector.shape_cast %37 : vector<1x1x4xf32> to vector<1x4xf32>
    %c0_13 = arith.constant 0 : index
    %c40 = arith.constant 40 : index
    %39 = vector.load %arg2[%c0_13, %c40] : memref<1x48xf32, #tpu.memory_space<vmem>>, vector<1x4xf32>
    tpu.vector_store %arg2[%c0_13, %c40], %38 {strides = array<i32>} : memref<1x48xf32, #tpu.memory_space<vmem>>, vector<1x4xf32>,
    %40 = vector.extract_strided_slice %30 {offsets = [1, 0, 0], sizes = [1, 1, 4], strides = [1, 1, 1]} : vector<2x1x4xf32> to vector<1x1x4xf32>
    %41 = vector.shape_cast %40 : vector<1x1x4xf32> to vector<1x4xf32>
    %c0_14 = arith.constant 0 : index
    %c44 = arith.constant 44 : index
    %42 = vector.load %arg2[%c0_14, %c44] : memref<1x48xf32, #tpu.memory_space<vmem>>, vector<1x4xf32>
    tpu.vector_store %arg2[%c0_14, %c44], %41 {strides = array<i32>} : memref<1x48xf32, #tpu.memory_space<vmem>>, vector<1x4xf32>,
    return
  }
  func.func @transform_0(%arg0: i32) -> (i32, i32, i32) {
    %c0_i32 = arith.constant 0 : i32
    %c0_i32_0 = arith.constant 0 : i32
    %c0_i32_1 = arith.constant 0 : i32
    return %c0_i32, %arg0, %c0_i32_0 : i32, i32, i32
  }
  func.func @transform_1(%arg0: i32) -> (i32, i32) {
    %c0_i32 = arith.constant 0 : i32
    %c0_i32_0 = arith.constant 0 : i32
    return %arg0, %c0_i32 : i32, i32
  }
}

</mosaic_0001>

<llo_original>
// kernel: tpu_custom_call.1
$region0: #{tpu_custom_call.1}
  #allocation0 [shape = 'u32[]', space=smem, size = 0x4, offset = 0x4, fixed_abs, tag = 'smem constant byte address 0x4 - core index']
  #allocation1 [shape = 'u32[72,128]{1,0:T(1,128)}', space=vmem, size = 0x9000, scoped, tag = 'internal scratch']
  %s0 = inlined_call_operand.hbm [shape: f32[2,1,12], index: 0, kind: input, shape index: {}]
  %s1 = inlined_call_operand.hbm [shape: f32[1,48], index: 1, kind: output, shape index: {}]
  %s2 = sld [smem:[#allocation0]]
  $region18: #{tpu_custom_call.1} parent=0
    _
  %s4 = ssub.s32 1, %s2
  %s5 = scalar_select 0, %s4, %s2
  $region1: #{tpu_custom_call.1} parent=0
    #allocation2 [shape = 'u8[1024]{0}', space=vmem, size = 0x400, scoped, tag = 'input window, operand 0, single buffered']
    #allocation3 [shape = 's32[1]{0}', space=sflag, size = 0x4, scoped, tag = 'scoped memory for tpu_custom_call.1']
    #allocation4 [shape = 's32[1]{0}', space=sflag, size = 0x4, scoped, tag = 'scoped memory for tpu_custom_call.1']
    #allocation5 [shape = 'u8[512]{0}', space=vmem, size = 0x400, scoped, tag = 'output window, operand 0, single buffered']
    %6 = vsyncpa [#allocation3], 0
    %7 = vsyncpa [#allocation4], 0
    // Predicated region
    $region2: #{tpu_custom_call.1} parent=1 // pred_check
      _
    $region3: #{tpu_custom_call.1} parent=1 // pred_check_branch
      %9 = sbr.rel (0) target = $region5
    $region4: #{tpu_custom_call.1} parent=1 // pred_region
      %11 = vsyncadd [#allocation3], 0
      %s12 = sshll.u32 %s0, 4
      %s13 = int_to_ptr.hbm [resolvable:$true] %s12
      %s14 = sshll.u32 [#allocation2], 4
      %s15 = int_to_ptr.vmem [resolvable:$true] %s14
      %20 = dma.hbm_to_vmem [thread:$0]  %s13, 32, %s15, [#allocation3], 16, 16, 1
    $region5: #{tpu_custom_call.1} parent=1 // pred_fallthru
      _
    // Predicated region
    $region6: #{tpu_custom_call.1} parent=1 // pred_check
      _
    $region7: #{tpu_custom_call.1} parent=1 // pred_check_branch
      %22 = sbr.rel (0) target = $region9
    $region8: #{tpu_custom_call.1} parent=1 // pred_region
      %24 = dma.done [#allocation3], 32
    $region9: #{tpu_custom_call.1} parent=1 // pred_fallthru
      _
    %v25 = vld [vmem:[#allocation2] sm:$0x1]
    %v26 = vld [vmem:[#allocation2 + $0x1] sm:$0x1]
    %v27 = vtanh.pop %v25
    %v28 = vtanh.pop %v26
    %v29 = vadd.f32 %v27, 1.2
    %v30 = vadd.f32 %v28, 1.2
    %vm31 = vcmask 24576
    %32 = vst.msk [vmem:[#allocation5] sm:$0x1] %vm31, %v29
    %v34 = vperm.slane %v29, 0
    %35 = vrot.lane.b32.xlu0 %v34, 4
    %v36 = vpop.permute.xlu0 %35
    %vm38 = vcmask 57376
    %39 = vst.msk [vmem:[#allocation5] sm:$0x1] %vm38, %v36
    %v41 = vperm.slane %v30, 0
    %42 = vrot.lane.b32.xlu0 %v41, 8
    %v43 = vpop.permute.xlu0 %42
    %vm45 = vcmask 90176
    %46 = vst.msk [vmem:[#allocation5] sm:$0x1] %vm45, %v43
    %47 = vrot.lane.b32.xlu0 %v41, 12
    %v48 = vpop.permute.xlu0 %47
    %vm50 = vcmask 122976
    %51 = vst.msk [vmem:[#allocation5] sm:$0x1] %vm50, %v48
    %52 = vrot.lane.b32.xlu0 %v34, 12
    %v53 = vpop.permute.xlu0 %52
    %vm55 = vcmask 155776
    %56 = vst.msk [vmem:[#allocation5] sm:$0x1] %vm55, %v53
    %57 = vrot.lane.b32.xlu0 %v34, 16
    %v58 = vpop.permute.xlu0 %57
    %vm60 = vcmask 188576
    %61 = vst.msk [vmem:[#allocation5] sm:$0x1] %vm60, %v58
    %62 = vrot.lane.b32.xlu0 %v41, 20
    %v63 = vpop.permute.xlu0 %62
    %vm65 = vcmask 221376
    %66 = vst.msk [vmem:[#allocation5] sm:$0x1] %vm65, %v63
    %67 = vrot.lane.b32.xlu0 %v41, 24
    %v68 = vpop.permute.xlu0 %67
    %vm70 = vcmask 254176
    %71 = vst.msk [vmem:[#allocation5] sm:$0x1] %vm70, %v68
    %72 = vrot.lane.b32.xlu0 %v34, 24
    %v73 = vpop.permute.xlu0 %72
    %vm75 = vcmask 286976
    %76 = vst.msk [vmem:[#allocation5] sm:$0x1] %vm75, %v73
    %77 = vrot.lane.b32.xlu0 %v34, 28
    %v78 = vpop.permute.xlu0 %77
    %vm80 = vcmask 319776
    %81 = vst.msk [vmem:[#allocation5] sm:$0x1] %vm80, %v78
    %82 = vrot.lane.b32.xlu0 %v41, 32
    %v83 = vpop.permute.xlu0 %82
    %vm85 = vcmask 352576
    %86 = vst.msk [vmem:[#allocation5] sm:$0x1] %vm85, %v83
    %87 = vrot.lane.b32.xlu0 %v41, 36
    %v88 = vpop.permute.xlu0 %87
    %vm90 = vcmask 385376
    %91 = vst.msk [vmem:[#allocation5] sm:$0x1] %vm90, %v88
    // Predicated region
    $region10: #{tpu_custom_call.1} parent=1 // pred_check
      _
    $region11: #{tpu_custom_call.1} parent=1 // pred_check_branch
      %93 = sbr.rel (0) target = $region13
    $region12: #{tpu_custom_call.1} parent=1 // pred_region
      %95 = vsyncadd [#allocation4], 0
      %s97 = sshll.u32 [#allocation5], 4
      %s98 = int_to_ptr.vmem [resolvable:$true] %s97
      %s99 = sshll.u32 %s1, 4
      %s100 = int_to_ptr.hbm [resolvable:$true] %s99
      %102 = dma.vmem_to_hbm [thread:$0]  %s98, 16, %s100, [#allocation4]
    $region13: #{tpu_custom_call.1} parent=1 // pred_fallthru
      _
    // Predicated region
    $region14: #{tpu_custom_call.1} parent=1 // pred_check
      _
    $region15: #{tpu_custom_call.1} parent=1 // pred_check_branch
      %104 = sbr.rel (0) target = $region17
    $region16: #{tpu_custom_call.1} parent=1 // pred_region
      %106 = dma.done [#allocation4], 16
    $region17: #{tpu_custom_call.1} parent=1 // pred_fallthru
      _
    %107 = vsyncpa [#allocation3], 1
    %108 = vsyncpa [#allocation4], 1

</llo_original>
